<compile_context>
chip_gen: v6e
topology: v6e:2x2x1
jax: 0.10.0
libtpu: 0.0.40
codegen_flags: <defaults>
</compile_context>

<pallas_src>
import functools

import jax
import jax.numpy as jnp
from jax.experimental import pallas as pl
from jax.experimental.pallas import tpu as pltpu


# --------------------------------------------------------------------------- #
# Small helpers
# --------------------------------------------------------------------------- #
def _cdiv(a, b):
    return -(-a // b)


def _round_up(v, m):
    return _cdiv(v, m) * m


def _spec(block_shape, index_map, buffers=None):
    """BlockSpec; optionally request an explicit pipelining depth.

    buffers=1 single-buffers operands whose block index never changes
    (weight/bias) so the second pipeline buffer is not wasted.  Falls back to
    the default (double-buffered) spec if pipeline_mode/Buffered is missing.
    """
    if buffers is not None and hasattr(pl, "Buffered"):
        try:
            return pl.BlockSpec(block_shape, index_map,
                                pipeline_mode=pl.Buffered(buffers))
        except TypeError:
            pass
    return pl.BlockSpec(block_shape, index_map)


def _vmem_limit(estimate_bytes):
    """Explicit scoped-VMEM budget: >= the resident bytes we plan for (plus
    headroom), never above v7x's 64 MiB physical VMEM."""
    return int(min(max(estimate_bytes * 5 // 4 + (2 << 20), 32 << 20), 64 << 20))


def _recip(x, approx):
    if hasattr(pl, "reciprocal"):
        return pl.reciprocal(x, approx=approx)
    return 1.0 / x


def _apply_activation(y, activation, *, approx_recip):
    """Activation on an f32 [rows, O_pad] tile.  'softmax' normalizes the
    feature (last) axis, matching nn.Softmax(dim=1) on a pooled [B, O]."""
    if activation is None:
        return y
    if activation == "relu":
        return jnp.maximum(y, 0.0)
    if activation == "sigmoid":
        return jax.nn.sigmoid(y)
    if activation == "softmax":
        m = jnp.max(y, axis=-1, keepdims=True)
        e = jnp.exp(y - m)
        denom = jnp.sum(e, axis=-1, keepdims=True)
        # EUP reciprocal; approximate only at reduced output precision.
        return e * _recip(denom, approx_recip)
    raise NotImplementedError(activation)


# --------------------------------------------------------------------------- #
# Tile selection
# --------------------------------------------------------------------------- #
def _pick_row_tile(R):
    """Row tile: multiple of 8 (sublane), MXU-friendly, and >=2 grid tiles
    whenever R allows it (both v7x TensorCores get work)."""
    if R <= 8:
        return R                                   # block == full dim
    return min(256, _round_up(_cdiv(R, 2), 8))


def _pick_mean_tiles(B, S, C, itemsize, per_buffer_budget=3 << 20):
    """(tile_b, tile_s) sized against a ~3 MiB per-DMA-buffer budget so the
    streamed [tile_b, tile_s, C] block stays in the low-MiB range for any C
    (v5e 16 MiB scoped default ... v7x 64 MiB physical VMEM)."""
    tile_b = B if B <= 8 else min(256, _round_up(_cdiv(B, 2), 8))
    if S <= 8:
        tile_s = S                                 # block == full seq dim
    else:
        t = per_buffer_budget // max(1, tile_b * C * itemsize)
        tile_s = min(max(8, (t // 8) * 8), max(8, (S // 8) * 8))
    # If even the minimum seq tile blows the budget (huge C), shrink tile_b.
    if tile_b > 8 and tile_b * tile_s * C * itemsize > 2 * per_buffer_budget:
        t = (2 * per_buffer_budget) // max(1, tile_s * C * itemsize)
        tile_b = max(8, (t // 8) * 8)
    return tile_b, tile_s


# --------------------------------------------------------------------------- #
# Row-tiled projection kernel: rows [TILE_R, C] @ weight [C, O_pad] + bias.
# Used for 'cls' (rows = class tokens) and 'none' (rows = all tokens).
# --------------------------------------------------------------------------- #
def _proj_kernel(x_ref, w_ref, b_ref, o_ref, *, activation, mxu_dtype,
                 approx_recip):
    x = x_ref[...]
    if mxu_dtype is not None:
        x = x.astype(mxu_dtype)        # opt-in bf16 feed -> full-rate MXU
    y = jnp.dot(x, w_ref[...], preferred_element_type=jnp.float32)
    y = y + b_ref[...].astype(jnp.float32)
    y = _apply_activation(y, activation, approx_recip=approx_recip)
    o_ref[...] = y.astype(o_ref.dtype)


def _project_rows(rows, weight_p, bias2d, activation, *, mxu_dtype,
                  approx_recip):
    """rows [R, C] -> [R, O_pad].  No row padding: the last (partial) row tile
    uses clipped DMAs; rows are independent so garbage rows never reach HBM."""
    R, C = rows.shape
    O_pad = weight_p.shape[1]
    tile_r = _pick_row_tile(R)

    est = (2 * C * O_pad * weight_p.dtype.itemsize          # weight (2x safe)
           + 2 * O_pad * bias2d.dtype.itemsize
           + 2 * tile_r * C * rows.dtype.itemsize           # streamed rows
           + 2 * tile_r * O_pad * rows.dtype.itemsize)      # output tiles

    kernel = functools.partial(_proj_kernel, activation=activation,
                               mxu_dtype=mxu_dtype, approx_recip=approx_recip)
    return pl.pallas_call(
        kernel,
        out_shape=jax.ShapeDtypeStruct((R, O_pad), rows.dtype),
        grid=(_cdiv(R, tile_r),),
        in_specs=[
            pl.BlockSpec((tile_r, C), lambda i: (i, 0)),      # streamed rows
            _spec((C, O_pad), lambda i: (0, 0), buffers=1),   # resident weight
            _spec((1, O_pad), lambda i: (0, 0), buffers=1),   # resident bias
        ],
        out_specs=pl.BlockSpec((tile_r, O_pad), lambda i: (i, 0)),
        compiler_params=pltpu.CompilerParams(
            dimension_semantics=("parallel",),
            vmem_limit_bytes=_vmem_limit(est)),
    )(rows, weight_p, bias2d)


# --------------------------------------------------------------------------- #
# Mean-pool head kernel: stream seq tiles, accumulate the f32 sum in VMEM
# scratch, run the matmul / bias / activation once at the last seq step.
# --------------------------------------------------------------------------- #
def _mean_head_kernel(x_ref, w_ref, b_ref, o_ref, acc_ref, *, seq_len, tile_s,
                      inv_s, activation, mxu_dtype, approx_recip):
    s_idx = pl.program_id(1)

    @pl.when(s_idx == 0)
    def _():
        acc_ref[...] = jnp.zeros_like(acc_ref)

    x = x_ref[...].astype(jnp.float32)
    if seq_len % tile_s != 0:
        # Mask the ragged last seq tile: its out-of-bounds rows are undefined
        # and would otherwise pollute the sum.  Static no-op when it divides.
        pos = s_idx * tile_s + jax.lax.broadcasted_iota(
            jnp.int32, (1, tile_s, 1), 1)
        x = jnp.where(pos < seq_len, x, 0.0)
    acc_ref[...] += jnp.sum(x, axis=1)

    @pl.when(s_idx == pl.num_programs(1) - 1)
    def _():
        pooled = acc_ref[...] * inv_s
        # NOTE: with bf16 weights (or mxu_dtype) the pooled mean is downcast
        # before the matmul -> small precision loss vs an f32 reference.
        pooled = pooled.astype(mxu_dtype if mxu_dtype is not None
                               else w_ref.dtype)
        y = jnp.dot(pooled, w_ref[...], preferred_element_type=jnp.float32)
        y = y + b_ref[...].astype(jnp.float32)
        y = _apply_activation(y, activation, approx_recip=approx_recip)
        o_ref[...] = y.astype(o_ref.dtype)


def _mean_head(x, weight_p, bias2d, activation, *, mxu_dtype, approx_recip):
    B, S, C = x.shape
    O_pad = weight_p.shape[1]
    tile_b, tile_s = _pick_mean_tiles(B, S, C, x.dtype.itemsize)
    grid = (_cdiv(B, tile_b), _cdiv(S, tile_s))
    # Deeper pipelining on the streamed x only when the seq tiles are tiny.
    nbuf = 3 if (tile_s <= 16 and grid[1] > 3) else None

    est = (2 * C * O_pad * weight_p.dtype.itemsize
           + 2 * O_pad * bias2d.dtype.itemsize
           + (nbuf or 2) * tile_b * tile_s * C * x.dtype.itemsize
           + 2 * tile_b * O_pad * x.dtype.itemsize
           + 4 * tile_b * C)                                  # f32 scratch

    kernel = functools.partial(
        _mean_head_kernel, seq_len=S, tile_s=tile_s, inv_s=1.0 / S,
        activation=activation, mxu_dtype=mxu_dtype, approx_recip=approx_recip)
    return pl.pallas_call(
        kernel,
        out_shape=jax.ShapeDtypeStruct((B, O_pad), x.dtype),
        grid=grid,
        in_specs=[
            _spec((tile_b, tile_s, C), lambda b, s: (b, s, 0), buffers=nbuf),
            _spec((C, O_pad), lambda b, s: (0, 0), buffers=1),  # resident W
            _spec((1, O_pad), lambda b, s: (0, 0), buffers=1),  # resident bias
        ],
        out_specs=pl.BlockSpec((tile_b, O_pad), lambda b, s: (b, 0)),
        scratch_shapes=[pltpu.VMEM((tile_b, C), jnp.float32)],
        compiler_params=pltpu.CompilerParams(
            dimension_semantics=("parallel", "arbitrary"),
            vmem_limit_bytes=_vmem_limit(est)),
    )(x, weight_p, bias2d)


# --------------------------------------------------------------------------- #
# Public wrapper
# --------------------------------------------------------------------------- #
def vision_transformer_basic_head(x, weight, bias, *, seq_pool_type="cls",
                                  activation=None, dropout_rate=0.5,
                                  mxu_dtype=None):
    """x: [B, S, C]; weight: [C, O] (= nn.Linear.weight.T); bias: [O].

    mxu_dtype: optional reduced-precision dtype (e.g. jnp.bfloat16) used to
    feed the MXU on f32 models (f32 accumulation kept). None = native dtype.
    """
    del dropout_rate  # nn.Dropout is an identity at inference time.
    assert seq_pool_type in ("cls", "mean", "none")

    B, S, C = x.shape
    O = weight.shape[1]
    O_pad = _round_up(O, 128)          # lane-dense output stores

    # Softmax over the feature dim (dim=1 of the pooled [B, O] output) is done
    # in-kernel.  For seq_pool_type='none', nn.Softmax(dim=1) on the [B, S, O]
    # output normalizes over the *sequence* dim, which spans row tiles, so it
    # is applied as plain JAX after the kernel.
    softmax_in_kernel = (activation == "softmax"
                         and seq_pool_type in ("cls", "mean"))
    act_in_kernel = activation
    if activation == "softmax" and not softmax_in_kernel:
        act_in_kernel = None
    # Approximate EUP reciprocal only when the output precision tolerates it.
    approx_recip = jnp.dtype(x.dtype).itemsize < 4

    # Lane-dense O padding (weight/bias only — tiny, one-time).  For in-kernel
    # softmax the padded bias columns get -1e30 so exp() underflows to 0.
    if O_pad != O:
        weight_p = jnp.pad(weight, ((0, 0), (0, O_pad - O)))
        pad_val = -1e30 if softmax_in_kernel else 0.0
        bias_p = jnp.concatenate(
            [bias, jnp.full((O_pad - O,), pad_val, dtype=bias.dtype)])
    else:
        weight_p, bias_p = weight, bias
    if mxu_dtype is not None:
        weight_p = weight_p.astype(mxu_dtype)   # one-time cast; halves W DMA
    bias2d = bias_p.reshape(1, O_pad)

    if seq_pool_type == "cls":
        # Only the class token is read from HBM (~S x less traffic).  Kept in
        # the wrapper: a sublane-1 seq block in the BlockSpec would violate
        # the (8,128) tiling constraint.
        rows = x[:, 0, :]
        y = _project_rows(rows, weight_p, bias2d, act_in_kernel,
                          mxu_dtype=mxu_dtype,
                          approx_recip=approx_recip)[:, :O]
    elif seq_pool_type == "mean":
        y = _mean_head(x, weight_p, bias2d, act_in_kernel,
                       mxu_dtype=mxu_dtype, approx_recip=approx_recip)[:, :O]
    else:  # 'none' -> token-wise projection
        rows = x.reshape(B * S, C)              # metadata-only reshape
        y = _project_rows(rows, weight_p, bias2d, act_in_kernel,
                          mxu_dtype=mxu_dtype,
                          approx_recip=approx_recip)[:, :O]
        y = y.reshape(B, S, O)
        if activation == "softmax":
            y = jax.nn.softmax(y, axis=1)       # over the sequence dim
    return y


# --------------------------------------------------------------------------- #
# Reference + smoke test
# --------------------------------------------------------------------------- #
def _reference(x, weight, bias, *, seq_pool_type="cls", activation=None):
    if seq_pool_type == "cls":
        p = x[:, 0, :]
    elif seq_pool_type == "mean":
        p = jnp.mean(x, axis=1)
    else:
        p = x
    y = p @ weight + bias
    if activation == "relu":
        y = jnp.maximum(y, 0.0)
    elif activation == "sigmoid":
        y = jax.nn.sigmoid(y)
    elif activation == "softmax":
        y = jax.nn.softmax(y, axis=1)
    return y


if __name__ == "__main__":
    key = jax.random.PRNGKey(0)

    def run_suite(B, S, C, O, configs, *, mxu_dtype=None, atol=1e-5, rtol=1e-5):
        kx, kw, kb = jax.random.split(jax.random.fold_in(key, 1000 * B + S), 3)
        x = jax.random.normal(kx, (B, S, C), dtype=jnp.float32)
        bound = 1.0 / (C ** 0.5)
        weight = jax.random.uniform(kw, (C, O), minval=-bound, maxval=bound,
                                    dtype=jnp.float32)
        bias = jax.random.uniform(kb, (O,), minval=-bound, maxval=bound,
                                  dtype=jnp.float32)
        for pool, act in configs:
            out = jax.block_until_ready(vision_transformer_basic_head(
                x, weight, bias, seq_pool_type=pool, activation=act,
                mxu_dtype=mxu_dtype))
            ref = _reference(x, weight, bias, seq_pool_type=pool,
                             activation=act)
            assert out.shape == ref.shape, (pool, act, out.shape, ref.shape)
            assert jnp.allclose(out, ref, atol=atol, rtol=rtol), (
                f"mismatch pool={pool} act={act} B={B} S={S} mxu={mxu_dtype}")

    full = [("cls", None), ("cls", "softmax"),
            ("mean", "relu"), ("mean", "sigmoid"), ("mean", "softmax"),
            ("none", None), ("none", "relu"), ("none", "softmax")]
    # Aligned small shapes.
    run_suite(2, 8, 32, 16, full)
    # Ragged shapes: exercise partial row/batch tiles and the masked seq tile.
    run_suite(10, 9, 32, 16,
              [("cls", None), ("mean", "relu"), ("mean", "softmax"),
               ("none", "softmax")])
    # Opt-in bf16 MXU feed (v6e/v7x fast path) at reduced tolerance.
    run_suite(2, 8, 32, 16, [("cls", None), ("mean", "relu"), ("none", None)],
              mxu_dtype=jnp.bfloat16, atol=2e-2, rtol=2e-2)

    print("KERNEL_OK")
</pallas_src>

<mosaic_0001>
module attributes {stable_mosaic.version = 11 : i64} {
  func.func @_proj_kernel(%arg0: i32, %arg1: memref<2x32xf32, #tpu.memory_space<vmem>>, %arg2: memref<32x128xf32, #tpu.memory_space<vmem>>, %arg3: memref<1x128xf32, #tpu.memory_space<vmem>>, %arg4: memref<2x128xf32, #tpu.memory_space<vmem>>) attributes {dimension_semantics = [#tpu.dimension_semantics<parallel>], iteration_bounds = array<i64: 1>, scalar_prefetch = 0 : i64, scratch_operands = 0 : i64, tpu.core_type = #tpu.core_type<tc>, window_params = [{transform_indices = @transform_0, window_bounds = array<i64: 2, 32>}, {pipeline_mode = #tpu.pipeline_mode<synchronous>, transform_indices = @transform_1, window_bounds = array<i64: 32, 128>}, {pipeline_mode = #tpu.pipeline_mode<synchronous>, transform_indices = @transform_2, window_bounds = array<i64: 1, 128>}, {transform_indices = @transform_3, window_bounds = array<i64: 2, 128>}]} {
    %c0 = arith.constant 0 : index
    %c0_0 = arith.constant 0 : index
    %0 = vector.load %arg1[%c0, %c0_0] : memref<2x32xf32, #tpu.memory_space<vmem>>, vector<2x32xf32>
    %c0_1 = arith.constant 0 : index
    %c0_2 = arith.constant 0 : index
    %1 = vector.load %arg2[%c0_1, %c0_2] : memref<32x128xf32, #tpu.memory_space<vmem>>, vector<32x128xf32>
    %cst = arith.constant dense<0.000000e+00> : vector<2x128xf32>
    %2 = tpu.matmul %0, %1, %cst {dimension_numbers = #tpu.dot_dimension_numbers<[1], [0], [0], [1], [0, 0, 1, 1], [], []>} : vector<2x32xf32>, vector<32x128xf32>, vector<2x128xf32> -> vector<2x128xf32>
    %c0_3 = arith.constant 0 : index
    %c0_4 = arith.constant 0 : index
    %3 = vector.load %arg3[%c0_3, %c0_4] : memref<1x128xf32, #tpu.memory_space<vmem>>, vector<1x128xf32>
    %4 = vector.broadcast %3 : vector<1x128xf32> to vector<2x128xf32>
    %5 = arith.addf %2, %4 : vector<2x128xf32>
    %c0_5 = arith.constant 0 : index
    %c0_6 = arith.constant 0 : index
    %6 = vector.load %arg4[%c0_5, %c0_6] : memref<2x128xf32, #tpu.memory_space<vmem>>, vector<2x128xf32>
    tpu.vector_store %arg4[%c0_5, %c0_6], %5 {strides = array<i32>} : memref<2x128xf32, #tpu.memory_space<vmem>>, vector<2x128xf32>,
    return
  }
  func.func @transform_0(%arg0: i32) -> (i32, i32) {
    %c0_i32 = arith.constant 0 : i32
    %c0_i32_0 = arith.constant 0 : i32
    return %arg0, %c0_i32 : i32, i32
  }
  func.func @transform_1(%arg0: i32) -> (i32, i32) {
    %c0_i32 = arith.constant 0 : i32
    %c0_i32_0 = arith.constant 0 : i32
    %c0_i32_1 = arith.constant 0 : i32
    return %c0_i32, %c0_i32_0 : i32, i32
  }
  func.func @transform_2(%arg0: i32) -> (i32, i32) {
    %c0_i32 = arith.constant 0 : i32
    %c0_i32_0 = arith.constant 0 : i32
    %c0_i32_1 = arith.constant 0 : i32
    return %c0_i32, %c0_i32_0 : i32, i32
  }
  func.func @transform_3(%arg0: i32) -> (i32, i32) {
    %c0_i32 = arith.constant 0 : i32
    %c0_i32_0 = arith.constant 0 : i32
    return %arg0, %c0_i32 : i32, i32
  }
}

</mosaic_0001>

<llo_original>
// kernel: tpu_custom_call.1
$region0: #{tpu_custom_call.1}
  #allocation0 [shape = 'u32[]', space=smem, size = 0x4, offset = 0x4, fixed_abs, tag = 'smem constant byte address 0x4 - core index']
  #allocation1 [shape = 'u32[144,128]{1,0:T(1,128)}', space=vmem, size = 0x12000, scoped, tag = 'internal scratch']
  %s0 = inlined_call_operand.hbm [shape: f32[2,32], index: 0, kind: input, shape index: {}]
  %s1 = inlined_call_operand.hbm [shape: f32[32,128], index: 1, kind: input, shape index: {}]
  %s2 = inlined_call_operand.vmem [shape: f32[1,128], index: 2, kind: input, shape index: {}]
  %s3 = inlined_call_operand.hbm [shape: f32[2,128], index: 3, kind: output, shape index: {}]
  %s4 = sld [smem:[#allocation0]]
  $region30: #{tpu_custom_call.1} parent=0
    _
  %s6 = ssub.s32 1, %s4
  %s7 = scalar_select 0, %s6, %s4
  $region1: #{tpu_custom_call.1} parent=0
    #allocation2 [shape = 'u8[1024]{0}', space=vmem, size = 0x400, scoped, tag = 'input window, operand 0, single buffered']
    #allocation3 [shape = 's32[1]{0}', space=sflag, size = 0x4, scoped, tag = 'scoped memory for tpu_custom_call.1']
    #allocation4 [shape = 's32[1]{0}', space=sflag, size = 0x4, scoped, tag = 'scoped memory for tpu_custom_call.1']
    #allocation5 [shape = 'u8[16384]{0}', space=vmem, size = 0x4000, scoped, tag = 'input window, operand 1, single buffered']
    #allocation6 [shape = 's32[1]{0}', space=sflag, size = 0x4, scoped, tag = 'scoped memory for tpu_custom_call.1']
    #allocation7 [shape = 'u8[1024]{0}', space=vmem, size = 0x400, scoped, tag = 'output window, operand 0, single buffered']
    %8 = vsyncpa [#allocation3], 0
    %9 = vsyncpa [#allocation6], 0
    %10 = vsyncpa [#allocation4], 0
    // Predicated region
    $region2: #{tpu_custom_call.1} parent=1 // pred_check
      _
    $region3: #{tpu_custom_call.1} parent=1 // pred_check_branch
      %12 = sbr.rel (0) target = $region5
    $region4: #{tpu_custom_call.1} parent=1 // pred_region
      %s14 = ssub.s32 32, 32
      %15 = vsyncadd [#allocation3], %s14
      %s17 = sshll.u32 [#allocation2], 4
      %s18 = int_to_ptr.vmem [resolvable:$true] %s17
      %20 = dma.hbm_to_vmem [thread:$0]  %s0, 32, %s18, [#allocation3]
    $region5: #{tpu_custom_call.1} parent=1 // pred_fallthru
      _
    // Predicated region
    $region6: #{tpu_custom_call.1} parent=1 // pred_check
      _
    $region7: #{tpu_custom_call.1} parent=1 // pred_check_branch
      %22 = sbr.rel (0) target = $region9
    $region8: #{tpu_custom_call.1} parent=1 // pred_region
      %s24 = ssub.s32 512, 512
      %25 = vsyncadd [#allocation6], %s24
      %s26 = sshll.u32 [#allocation5], 4
      %s27 = int_to_ptr.vmem [resolvable:$true] %s26
      %32 = dma.hbm_to_vmem [thread:$0]  %s1, 512, %s27, [#allocation6], 128, 128, 8
    $region9: #{tpu_custom_call.1} parent=1 // pred_fallthru
      _
    // Predicated region
    $region10: #{tpu_custom_call.1} parent=1 // pred_check
      _
    $region11: #{tpu_custom_call.1} parent=1 // pred_check_branch
      %34 = sbr.rel (0) target = $region13
    $region12: #{tpu_custom_call.1} parent=1 // pred_region
      _
    $region13: #{tpu_custom_call.1} parent=1 // pred_fallthru
      _
    // Predicated region
    $region14: #{tpu_custom_call.1} parent=1 // pred_check
      _
    $region15: #{tpu_custom_call.1} parent=1 // pred_check_branch
      %36 = sbr.rel (0) target = $region17
    $region16: #{tpu_custom_call.1} parent=1 // pred_region
      %37 = dma.done [#allocation3], 32
    $region17: #{tpu_custom_call.1} parent=1 // pred_fallthru
      _
    // Predicated region
    $region18: #{tpu_custom_call.1} parent=1 // pred_check
      _
    $region19: #{tpu_custom_call.1} parent=1 // pred_check_branch
      %39 = sbr.rel (0) target = $region21
    $region20: #{tpu_custom_call.1} parent=1 // pred_region
      %40 = dma.done [#allocation6], 512
    $region21: #{tpu_custom_call.1} parent=1 // pred_fallthru
      _
    %v41 = vld [vmem:[#allocation2] sm:$0x3]
    %v42 = vld [vmem:[#allocation5] sm:$0xff]
    %v43 = vld [vmem:[#allocation5 + $0x8] sm:$0xff]
    %v44 = vld [vmem:[#allocation5 + $0x10] sm:$0xff]
    %v45 = vld [vmem:[#allocation5 + $0x18] sm:$0xff]
    %v46 = vld [vmem:[%s2] sm:$0x1]
    %v48 = vlaneseq
    %v49 = vshrl.u32 %v48, 7
    %v50 = vsub.s32 0, %v49
    %v51 = vrot.slane %v46, %v50
    %vm53 = vcmask 261120
    %v55 = vsel %vm53, %v41, 0
    %57 = vmatprep.subr.mxu0 0.0
    %58 = vmatpush1.msra.mxu0 0.0
    %59 = vmatprep.subr.mxu0 0.0
    %60 = vmatpush1.msra.mxu0 0.0
    %61 = vmatprep.subr.mxu0 0.0
    %62 = vmatpush1.msra.mxu0 0.0
    %63 = vmatprep.subr.mxu0 0.0
    %64 = vmatpush1.msra.mxu0 0.0
    %65 = vmatprep.subr.mxu0 0.0
    %66 = vmatpush1.msra.mxu0 0.0
    %67 = vmatprep.subr.mxu0 0.0
    %68 = vmatpush1.msra.mxu0 0.0
    %69 = vmatprep.subr.mxu0 0.0
    %70 = vmatpush1.msra.mxu0 0.0
    %71 = vmatprep.subr.mxu0 0.0
    %72 = vmatpush1.msra.mxu0 0.0
    %73 = vmatprep.subr.mxu0 0.0
    %74 = vmatpush1.msra.mxu0 0.0
    %75 = vmatprep.subr.mxu0 0.0
    %76 = vmatpush1.msra.mxu0 0.0
    %77 = vmatprep.subr.mxu0 0.0
    %78 = vmatpush1.msra.mxu0 0.0
    %79 = vmatprep.subr.mxu0 0.0
    %80 = vmatpush1.msra.mxu0 0.0
    %81 = vmatprep.subr.mxu0 0.0
    %82 = vmatpush1.msra.mxu0 %v45
    %83 = vmatprep.subr.mxu0 0.0
    %84 = vmatpush1.msra.mxu0 %v44
    %85 = vmatprep.subr.mxu0 0.0
    %86 = vmatpush1.msra.mxu0 %v43
    %87 = vmatprep.subr.mxu0 0.0
    %88 = vmatpush1.msra.mxu0 %v42
    %89 = vmatprep.subr.mxu0 0.0
    %90 = vmatpush2.msra.mxu0 0.0
    %91 = vmatprep.subr.mxu0 0.0
    %92 = vmatpush2.msra.mxu0 0.0
    %93 = vmatprep.subr.mxu0 0.0
    %94 = vmatpush2.msra.mxu0 0.0
    %95 = vmatprep.subr.mxu0 0.0
    %96 = vmatpush2.msra.mxu0 0.0
    %97 = vmatprep.subr.mxu0 0.0
    %98 = vmatpush2.msra.mxu0 0.0
    %99 = vmatprep.subr.mxu0 0.0
    %100 = vmatpush2.msra.mxu0 0.0
    %101 = vmatprep.subr.mxu0 0.0
    %102 = vmatpush2.msra.mxu0 0.0
    %103 = vmatprep.subr.mxu0 0.0
    %104 = vmatpush2.msra.mxu0 0.0
    %105 = vmatprep.subr.mxu0 0.0
    %106 = vmatpush2.msra.mxu0 0.0
    %107 = vmatprep.subr.mxu0 0.0
    %108 = vmatpush2.msra.mxu0 0.0
    %109 = vmatprep.subr.mxu0 0.0
    %110 = vmatpush2.msra.mxu0 0.0
    %111 = vmatprep.subr.mxu0 0.0
    %112 = vmatpush2.msra.mxu0 0.0
    %113 = vmatprep.subr.mxu0 0.0
    %114 = vmatpush2.msra.mxu0 0.0
    %115 = vmatprep.subr.mxu0 0.0
    %116 = vmatpush2.msra.mxu0 0.0
    %117 = vmatprep.subr.mxu0 0.0
    %118 = vmatpush2.msra.mxu0 0.0
    %119 = vmatprep.subr.mxu0 0.0
    %120 = vmatpush2.msra.mxu0 0.0
    %121 = vmatprep.mubr.f32.mxu0 0.0
    %122 = vmatmul.mubr.f32.gmra.mxu0 %v55
    %v123 = vpop.f32.mrf.mxu0
    %v124 = vadd.f32 %v51, %v123
    %v125 = vpop.f32.mrf.mxu0
    %126 = vdwg.mxu0
    %127 = vst [vmem:[#allocation7] sm:$0x3] %v124
    // Predicated region
    $region22: #{tpu_custom_call.1} parent=1 // pred_check
      _
    $region23: #{tpu_custom_call.1} parent=1 // pred_check_branch
      %129 = sbr.rel (0) target = $region25
    $region24: #{tpu_custom_call.1} parent=1 // pred_region
      %s131 = ssub.s32 32, 32
      %132 = vsyncadd [#allocation4], %s131
      %s134 = sshll.u32 [#allocation7], 4
      %s135 = int_to_ptr.vmem [resolvable:$true] %s134
      %137 = dma.vmem_to_hbm [thread:$0]  %s135, 32, %s3, [#allocation4]
    $region25: #{tpu_custom_call.1} parent=1 // pred_fallthru
      _
    // Predicated region
    $region26: #{tpu_custom_call.1} parent=1 // pred_check
      _
    $region27: #{tpu_custom_call.1} parent=1 // pred_check_branch
      %139 = sbr.rel (0) target = $region29
    $region28: #{tpu_custom_call.1} parent=1 // pred_region
      %140 = dma.done [#allocation4], 32
    $region29: #{tpu_custom_call.1} parent=1 // pred_fallthru
      _
    %141 = vsyncpa [#allocation3], 1
    %142 = vsyncpa [#allocation6], 1
    %143 = vsyncpa [#allocation4], 1

</llo_original>
